<compile_context>
chip_gen: v6e
topology: v6e:2x2x1
jax: 0.10.0
libtpu: 0.0.40
codegen_flags: <defaults>
</compile_context>

<pallas_src>
import jax
import jax.numpy as jnp
from jax import lax
from jax.experimental import pallas as pl
from jax.experimental.pallas import tpu as pltpu


def temcam_kernel(gamma_ref, x_ref, xt_ref, o_ref, acc_ref):
    # x_ref / xt_ref / o_ref blocks: (1, C, n_tile).
    # acc_ref: (C, C) f32 scratch -- energy accumulator in phase 0, attention in phase 1.
    phase = pl.program_id(1)
    nt = pl.program_id(2)

    # ---------- phase 0: energy += x_tile @ x_tile^T (bf16 in, f32 accum) ----------
    @pl.when(phase == 0)
    def _():
        @pl.when(nt == 0)
        def _():
            acc_ref[...] = jnp.zeros_like(acc_ref)

        x_bf = x_ref[0].astype(jnp.bfloat16)                  # (C, n_tile)
        acc_ref[...] += lax.dot_general(
            x_bf, x_bf,
            dimension_numbers=(((1,), (1,)), ((), ())),        # contract over N -> (C, C)
            preferred_element_type=jnp.float32,
        )

    # ---------- phase 1: softmax once, then out = gamma * attn @ xt_tile + x_tile ----------
    @pl.when(phase == 1)
    def _():
        @pl.when(nt == 0)
        def _():
            energy = acc_ref[...]
            # softmax(rowmax - energy) == softmax(-energy); stable form uses the
            # row min as the shift so exponents are <= 0 (single reduction).
            shifted = jnp.min(energy, axis=-1, keepdims=True) - energy
            e = jnp.exp(shifted)
            inv = pl.reciprocal(jnp.sum(e, axis=-1, keepdims=True), approx=True)
            acc_ref[...] = e * inv                             # attention, f32 (C, C)

        attn_bf = acc_ref[...].astype(jnp.bfloat16)            # tiny (C, C) cast
        out = jnp.dot(attn_bf, xt_ref[0].astype(jnp.bfloat16),
                      preferred_element_type=jnp.float32)      # (C, n_tile) f32
        gamma = gamma_ref[0]
        o_ref[0] = (gamma * out + x_ref[0].astype(jnp.float32)).astype(o_ref.dtype)


def _pick_n_tile(n, max_tile=1024):
    """Largest tile that is either the full N or a multiple-of-128 divisor of N."""
    if n <= max_tile:
        return n
    best = None
    t = 128
    while t <= max_tile:
        if n % t == 0:
            best = t
        t += 128
    # TODO(synk): if N has no multiple-of-128 divisor <= max_tile, pad N in the
    # wrapper instead of falling back to one full-width block.
    return best if best is not None else n


def temcam_module(x, xt, gamma, n_tile=None):
    """x, xt: (B, C, H, W); gamma: (1,) float32. Returns (B, C, H, W)."""
    B, C, H, W = x.shape
    N = H * W
    xf = x.reshape(B, C, N)
    xtf = xt.reshape(B, C, N)
    gamma = jnp.asarray(gamma, dtype=jnp.float32).reshape((1,))

    if n_tile is None:
        n_tile = _pick_n_tile(N)
    assert N % n_tile == 0 and (n_tile == N or n_tile % 128 == 0), (N, n_tile)
    num_nt = N // n_tile

    # Scoped-VMEM budget: x/xt/out double-buffered (C, n_tile) slabs + (C, C) scratch
    # + headroom; capped at 64 MiB so the request is valid on v7x as well.
    itemsize = jnp.dtype(x.dtype).itemsize
    vmem_bytes = 3 * 2 * C * n_tile * itemsize + C * C * 4 + (4 << 20)
    vmem_limit = int(min(max(vmem_bytes, 32 << 20), 64 << 20))

    out = pl.pallas_call(
        temcam_kernel,
        out_shape=jax.ShapeDtypeStruct((B, C, N), x.dtype),
        grid=(B, 2, num_nt),
        in_specs=[
            pl.BlockSpec(memory_space=pltpu.SMEM),                       # gamma scalar
            pl.BlockSpec((1, C, n_tile), lambda b, p, nt: (b, 0, nt)),   # x tiles (both phases)
            # xt is only consumed in phase 1; in phase 0 pin it to tile 0 so the block
            # index is constant (one DMA) and already correct at phase-1 nt=0.
            pl.BlockSpec((1, C, n_tile), lambda b, p, nt: (b, 0, nt * p)),
        ],
        # Output block index is constant through phase 0 (never written) and advances
        # with nt in phase 1 -> each (b, nt) slab written exactly once, lane-dense.
        out_specs=pl.BlockSpec((1, C, n_tile), lambda b, p, nt: (b, 0, nt * p)),
        scratch_shapes=[pltpu.VMEM((C, C), jnp.float32)],
        compiler_params=pltpu.CompilerParams(
            dimension_semantics=("parallel", "arbitrary", "arbitrary"),
            vmem_limit_bytes=vmem_limit),
    )(gamma, xf, xtf)

    return out.reshape(B, C, H, W)


def temcam_reference(x, xt, gamma):
    """Pure-JAX reference matching the PyTorch forward exactly."""
    B, C, H, W = x.shape
    q = x.reshape(B, C, -1)
    k = jnp.transpose(q, (0, 2, 1))
    energy = jnp.einsum('bcn,bnd->bcd', q, k)
    energy_new = jnp.max(energy, axis=-1, keepdims=True) - energy
    attention = jax.nn.softmax(energy_new, axis=-1)
    v = xt.reshape(B, C, -1)
    out = jnp.einsum('bcd,bdn->bcn', attention, v).reshape(B, C, H, W)
    return gamma * out + x


if __name__ == "__main__":
    key = jax.random.PRNGKey(0)
    kx, kxt = jax.random.split(key)

    B, C, H, W = 2, 4, 16, 16
    x = jax.random.normal(kx, (B, C, H, W), dtype=jnp.float32)
    xt = jax.random.normal(kxt, (B, C, H, W), dtype=jnp.float32)

    # Parameter from __init__: self.gamma = Parameter(torch.zeros(1))
    gamma0 = jnp.zeros((1,), dtype=jnp.float32)
    out = temcam_module(x, xt, gamma0)
    jax.block_until_ready(out)
    ref = temcam_reference(x, xt, gamma0)
    assert out.shape == (B, C, H, W)
    assert jnp.allclose(out, ref, atol=1e-5, rtol=1e-5)

    # Exercise the multi-tile (NT=2) path and the attention branch with a nonzero
    # gamma; bf16 MXU operands => compare with a relaxed tolerance.
    gamma1 = jnp.array([0.7], dtype=jnp.float32)
    out_t = temcam_module(x, xt, gamma1, n_tile=128)
    jax.block_until_ready(out_t)
    ref_t = temcam_reference(x, xt, gamma1)
    assert jnp.allclose(out_t, ref_t, atol=2e-2, rtol=2e-2)

    print("KERNEL_OK")
</pallas_src>

<mosaic_0001>
module attributes {stable_mosaic.version = 11 : i64} {
  func.func @temcam_kernel(%arg0: i32, %arg1: i32, %arg2: i32, %arg3: memref<1xf32, #tpu.memory_space<smem>>, %arg4: memref<1x4x256xf32, #tpu.memory_space<vmem>>, %arg5: memref<1x4x256xf32, #tpu.memory_space<vmem>>, %arg6: memref<1x4x256xf32, #tpu.memory_space<vmem>>, %arg7: memref<4x4xf32, #tpu.memory_space<vmem>>) attributes {dimension_semantics = [#tpu.dimension_semantics<parallel>, #tpu.dimension_semantics<arbitrary>, #tpu.dimension_semantics<arbitrary>], iteration_bounds = array<i64: 2, 2, 1>, scalar_prefetch = 0 : i64, scratch_operands = 1 : i64, tpu.core_type = #tpu.core_type<tc>, window_params = [{transform_indices = @transform_0, window_bounds = array<i64: 1>}, {transform_indices = @transform_1, window_bounds = array<i64: 1, 4, 256>}, {transform_indices = @transform_2, window_bounds = array<i64: 1, 4, 256>}, {transform_indices = @transform_3, window_bounds = array<i64: 1, 4, 256>}]} {
    %c0_i32 = arith.constant 0 : i32
    %0 = arith.cmpi eq, %arg1, %c0_i32 : i32
    %1 = arith.extui %0 : i1 to i32
    %c0_i32_0 = arith.constant 0 : i32
    %2 = arith.cmpi ne, %1, %c0_i32_0 : i32
    scf.if %2 {
      %c0_i32_2 = arith.constant 0 : i32
      %6 = arith.cmpi eq, %arg2, %c0_i32_2 : i32
      %7 = arith.extui %6 : i1 to i32
      %c0_i32_3 = arith.constant 0 : i32
      %8 = arith.cmpi ne, %7, %c0_i32_3 : i32
      scf.if %8 {
        %cst_10 = arith.constant 0.000000e+00 : f32
        %16 = vector.broadcast %cst_10 : f32 to vector<4x4xf32>
        %c0_11 = arith.constant 0 : index
        %c0_12 = arith.constant 0 : index
        %17 = vector.load %arg7[%c0_11, %c0_12] : memref<4x4xf32, #tpu.memory_space<vmem>>, vector<4x4xf32>
        tpu.vector_store %arg7[%c0_11, %c0_12], %16 {strides = array<i32>} : memref<4x4xf32, #tpu.memory_space<vmem>>, vector<4x4xf32>,
      } else {
      }
      %c0 = arith.constant 0 : index
      %c0_4 = arith.constant 0 : index
      %c0_5 = arith.constant 0 : index
      %9 = vector.load %arg4[%c0, %c0_4, %c0_5] : memref<1x4x256xf32, #tpu.memory_space<vmem>>, vector<1x4x256xf32>
      %10 = vector.shape_cast %9 : vector<1x4x256xf32> to vector<4x256xf32>
      %11 = arith.truncf %10 : vector<4x256xf32> to vector<4x256xbf16>
      %c0_6 = arith.constant 0 : index
      %c0_7 = arith.constant 0 : index
      %12 = vector.load %arg7[%c0_6, %c0_7] : memref<4x4xf32, #tpu.memory_space<vmem>>, vector<4x4xf32>
      %cst = arith.constant dense<0.000000e+00> : vector<4x4xf32>
      %13 = tpu.matmul %11, %11, %cst {dimension_numbers = #tpu.dot_dimension_numbers<[1], [1], [0], [0], [0, 0, 1, 0], [], []>} : vector<4x256xbf16>, vector<4x256xbf16>, vector<4x4xf32> -> vector<4x4xf32>
      %14 = arith.addf %12, %13 : vector<4x4xf32>
      %c0_8 = arith.constant 0 : index
      %c0_9 = arith.constant 0 : index
      %15 = vector.load %arg7[%c0_8, %c0_9] : memref<4x4xf32, #tpu.memory_space<vmem>>, vector<4x4xf32>
      tpu.vector_store %arg7[%c0_8, %c0_9], %14 {strides = array<i32>} : memref<4x4xf32, #tpu.memory_space<vmem>>, vector<4x4xf32>,
    } else {
    }
    %c1_i32 = arith.constant 1 : i32
    %3 = arith.cmpi eq, %arg1, %c1_i32 : i32
    %4 = arith.extui %3 : i1 to i32
    %c0_i32_1 = arith.constant 0 : i32
    %5 = arith.cmpi ne, %4, %c0_i32_1 : i32
    scf.if %5 {
      %c0_i32_2 = arith.constant 0 : i32
      %6 = arith.cmpi eq, %arg2, %c0_i32_2 : i32
      %7 = arith.extui %6 : i1 to i32
      %c0_i32_3 = arith.constant 0 : i32
      %8 = arith.cmpi ne, %7, %c0_i32_3 : i32
      scf.if %8 {
        %c0_15 = arith.constant 0 : index
        %c0_16 = arith.constant 0 : index
        %24 = vector.load %arg7[%c0_15, %c0_16] : memref<4x4xf32, #tpu.memory_space<vmem>>, vector<4x4xf32>
        %cst_17 = arith.constant dense<0x7F800000> : vector<4xf32>
        %25 = vector.multi_reduction <minimumf>, %24, %cst_17 [1] : vector<4x4xf32> to vector<4xf32>
        %26 = vector.shape_cast %25 : vector<4xf32> to vector<4x1xf32>
        %27 = vector.broadcast %26 : vector<4x1xf32> to vector<4x4xf32>
        %28 = arith.subf %27, %24 : vector<4x4xf32>
        %29 = math.exp %28 : vector<4x4xf32>
        %cst_18 = arith.constant dense<0.000000e+00> : vector<4xf32>
        %30 = vector.multi_reduction <add>, %29, %cst_18 [1] : vector<4x4xf32> to vector<4xf32>
        %31 = vector.shape_cast %30 : vector<4xf32> to vector<4x1xf32>
        %32 = tpu.reciprocal %31 {approx = true} : vector<4x1xf32> -> vector<4x1xf32>
        %33 = vector.broadcast %32 : vector<4x1xf32> to vector<4x4xf32>
        %34 = arith.mulf %29, %33 : vector<4x4xf32>
        %c0_19 = arith.constant 0 : index
        %c0_20 = arith.constant 0 : index
        %35 = vector.load %arg7[%c0_19, %c0_20] : memref<4x4xf32, #tpu.memory_space<vmem>>, vector<4x4xf32>
        tpu.vector_store %arg7[%c0_19, %c0_20], %34 {strides = array<i32>} : memref<4x4xf32, #tpu.memory_space<vmem>>, vector<4x4xf32>,
      } else {
      }
      %c0 = arith.constant 0 : index
      %c0_4 = arith.constant 0 : index
      %9 = vector.load %arg7[%c0, %c0_4] : memref<4x4xf32, #tpu.memory_space<vmem>>, vector<4x4xf32>
      %10 = arith.truncf %9 : vector<4x4xf32> to vector<4x4xbf16>
      %c0_5 = arith.constant 0 : index
      %c0_6 = arith.constant 0 : index
      %c0_7 = arith.constant 0 : index
      %11 = vector.load %arg5[%c0_5, %c0_6, %c0_7] : memref<1x4x256xf32, #tpu.memory_space<vmem>>, vector<1x4x256xf32>
      %12 = vector.shape_cast %11 : vector<1x4x256xf32> to vector<4x256xf32>
      %13 = arith.truncf %12 : vector<4x256xf32> to vector<4x256xbf16>
      %cst = arith.constant dense<0.000000e+00> : vector<4x256xf32>
      %14 = tpu.matmul %10, %13, %cst {dimension_numbers = #tpu.dot_dimension_numbers<[1], [0], [0], [1], [0, 0, 1, 1], [], []>} : vector<4x4xbf16>, vector<4x256xbf16>, vector<4x256xf32> -> vector<4x256xf32>
      %c0_8 = arith.constant 0 : index
      %15 = memref.load %arg3[%c0_8] : memref<1xf32, #tpu.memory_space<smem>>
      %16 = vector.broadcast %15 : f32 to vector<4x256xf32>
      %17 = arith.mulf %16, %14 : vector<4x256xf32>
      %c0_9 = arith.constant 0 : index
      %c0_10 = arith.constant 0 : index
      %c0_11 = arith.constant 0 : index
      %18 = vector.load %arg4[%c0_9, %c0_10, %c0_11] : memref<1x4x256xf32, #tpu.memory_space<vmem>>, vector<1x4x256xf32>
      %19 = vector.shape_cast %18 : vector<1x4x256xf32> to vector<4x256xf32>
      %20 = arith.addf %17, %19 : vector<4x256xf32>
      %c0_12 = arith.constant 0 : index
      %c0_13 = arith.constant 0 : index
      %c0_14 = arith.constant 0 : index
      %21 = vector.load %arg6[%c0_12, %c0_13, %c0_14] : memref<1x4x256xf32, #tpu.memory_space<vmem>>, vector<1x4x256xf32>
      %22 = vector.shape_cast %21 : vector<1x4x256xf32> to vector<4x256xf32>
      %23 = vector.shape_cast %20 : vector<4x256xf32> to vector<1x4x256xf32>
      tpu.vector_store %arg6[%c0_12, %c0_13, %c0_14], %23 {strides = array<i32>} : memref<1x4x256xf32, #tpu.memory_space<vmem>>, vector<1x4x256xf32>,
    } else {
    }
    return
  }
  func.func @transform_0(%arg0: i32, %arg1: i32, %arg2: i32) -> i32 {
    %c0_i32 = arith.constant 0 : i32
    %c0_i32_0 = arith.constant 0 : i32
    return %c0_i32 : i32
  }
  func.func @transform_1(%arg0: i32, %arg1: i32, %arg2: i32) -> (i32, i32, i32) {
    %c0_i32 = arith.constant 0 : i32
    %c0_i32_0 = arith.constant 0 : i32
    return %arg0, %c0_i32, %arg2 : i32, i32, i32
  }
  func.func @transform_2(%arg0: i32, %arg1: i32, %arg2: i32) -> (i32, i32, i32) {
    %0 = arith.muli %arg2, %arg1 : i32
    %c0_i32 = arith.constant 0 : i32
    %c0_i32_0 = arith.constant 0 : i32
    return %arg0, %c0_i32, %0 : i32, i32, i32
  }
  func.func @transform_3(%arg0: i32, %arg1: i32, %arg2: i32) -> (i32, i32, i32) {
    %0 = arith.muli %arg2, %arg1 : i32
    %c0_i32 = arith.constant 0 : i32
    %c0_i32_0 = arith.constant 0 : i32
    return %arg0, %c0_i32, %0 : i32, i32, i32
  }
}

</mosaic_0001>

<llo_original>
// kernel: tpu_custom_call.1
$region0: #{tpu_custom_call.1}
  #allocation0 [shape = 'u32[]', space=smem, size = 0x4, offset = 0x4, fixed_abs, tag = 'smem constant byte address 0x4 - core index']
  #allocation1 [shape = 'u32[144,128]{1,0:T(1,128)}', space=vmem, size = 0x12000, scoped, tag = 'internal scratch']
  #allocation2 [shape = 'f32[4,4]{1,0:T(4,128)}', space=vmem, size = 0x800, scoped, tag = 'scratch operand']
  #allocation3 [shape = 'f32[1]{0:T(128)S(6)}', space=smem, size = 0x200, scoped, tag = 'scoped memory for tpu_custom_call.1']
  %s0 = inlined_call_operand.<no memory space> [shape: f32[1], index: 0, kind: input, shape index: {}]
  %s1 = inlined_call_operand.hbm [shape: f32[2,4,256], index: 1, kind: input, shape index: {}]
  %s2 = inlined_call_operand.hbm [shape: f32[2,4,256], index: 2, kind: input, shape index: {}]
  %s3 = inlined_call_operand.hbm [shape: f32[2,4,256], index: 3, kind: output, shape index: {}]
  %s4 = sld [smem:[#allocation0]]
  $region69: #{tpu_custom_call.1} parent=0
    _
  %s6 = ssub.s32 1, %s4
  %s7 = scalar_select 0, %s6, %s4
  %8 = sst [smem:[#allocation3]] %s0
  $region1: #{tpu_custom_call.1} parent=0
    #allocation4 [shape = 'u8[8192]{0}', space=vmem, size = 0x2000, scoped, tag = 'input window, operand 1']
    #allocation5 [shape = 's32[2]{0}', space=sflag, size = 0x8, scoped, tag = 'scoped memory for tpu_custom_call.1']
    #allocation6 [shape = 's32[2]{0}', space=sflag, size = 0x8, scoped, tag = 'scoped memory for tpu_custom_call.1']
    #allocation7 [shape = 'u8[8192]{0}', space=vmem, size = 0x2000, scoped, tag = 'input window, operand 2']
    #allocation8 [shape = 's32[2]{0}', space=sflag, size = 0x8, scoped, tag = 'scoped memory for tpu_custom_call.1']
    #allocation9 [shape = 'u8[8192]{0}', space=vmem, size = 0x2000, scoped, tag = 'output window, operand 0']
    %9 = vsyncpa [#allocation5], 0
    %s10 = scalar_lea.sflag [#allocation5], 1
    %11 = vsyncpa %s10, 0
    %12 = vsyncpa [#allocation8], 0
    %s13 = scalar_lea.sflag [#allocation8], 1
    %14 = vsyncpa %s13, 0
    %15 = vsyncpa [#allocation6], 0
    %s16 = scalar_lea.sflag [#allocation6], 1
    %17 = vsyncpa %s16, 0
    loop: start=0, step=1, limit=6
    $region2: #{tpu_custom_call.1} parent=1 // loop_pre_header
      _
    $region3: #{tpu_custom_call.1} parent=1 // loop_header
      %s19 = sphi 0, %s23
      %p20 = scmp.ge.s32.totalorder %s19, 6
      %s26 = sphi 0, %s45
      %s27 = sphi 0, %s41
      %s28 = sphi 0, %s37
      %s29 = sphi 0, %s26
      %s30 = sphi 0, %s27
      %s31 = sphi 0, %s28
      %s32 = sphi 0, %s29
      %s33 = sphi 0, %s30
      %s34 = sphi 0, %s31
      %s46 = sphi 0, %s46
      %s48 = sphi 0, %s46
      %s49 = sphi 0, %s48
      %s63 = sphi 0, %s49
      %s71 = sphi 0, %s73
      %s74 = sphi 0, %s71
      %s75 = sphi 0, %s74
      %s91 = sphi 0, %s75
      %s101 = sphi 0, %s103
      %s104 = sphi 0, %s101
      %s105 = sphi 0, %s104
      %s121 = sphi 0, %s105
      %s131 = sphi 0, %s133
      %s134 = sphi 0, %s131
      %s135 = sphi 0, %s134
      %s151 = sphi 0, %s135
    $region4: #{tpu_custom_call.1} parent=1 // loop_header_branch
      %22 = sbr.rel (%p20) target = $region8
    $region5: #{tpu_custom_call.1} parent=1 // loop_body
      %s24 = ssub.s32 %s19, 1
      %s25 = ssub.s32 %s19, 2
      %s35 = sadd.s32 1, %s28
      %p36 = scmp.ge.s32.totalorder %s35, 1
      %s37 = scalar_select %p36, 0, %s35
      %s38 = sadd.s32 1, %s27
      %s39 = scalar_select %p36, %s38, %s27
      %p40 = scmp.ge.s32.totalorder %s39, 2
      %s41 = scalar_select %p40, 0, %s39
      %s42 = sadd.s32 1, %s26
      %s43 = scalar_select %p40, %s42, %s26
      %p44 = scmp.ge.s32.totalorder %s43, 2
      %s45 = scalar_select %p44, 0, %s43
      %s47 = sadd.s32 %s46, 1
      %p50 = scmp.eq.s32.totalorder %s19, 3
      %p51 = scmp.ne.s32.totalorder %s46, %s48
      %p52 = scmp.eq.s32.totalorder %s19, 0
      %p53 = por %p51, %p52
      %p54 = scmp.ne.s32.totalorder %s46, %s48
      %p55 = scmp.eq.s32.totalorder %s24, 3
      %p56 = por %p54, %p55
      %p57 = scmp.ne.s32.totalorder %s48, %s49
      %p58 = scmp.eq.s32.totalorder %s24, 0
      %p59 = por %p57, %p58
      %p60 = scmp.ne.s32.totalorder %s48, %s49
      %p61 = scmp.eq.s32.totalorder %s25, 3
      %p62 = por %p60, %p61
      %p64 = scmp.ne.s32.totalorder %s49, %s63
      %p65 = scmp.eq.s32.totalorder %s25, 0
      %p66 = por %p64, %p65
      %s67 = ssub.s32 %s26, %s45
      %s68 = ssub.s32 %s28, %s37
      %s69 = sor.u32 %s67, %s68
      %p70 = scmp.eq.s32.totalorder %s69, 0
      %s72 = sadd.s32 %s71, 1
      %s73 = scalar_select %p70, %s71, %s72
      %p76 = pneg %p70
      %p77 = scmp.eq.s32.totalorder %s19, 3
      %p78 = por %p76, %p77
      %p79 = scmp.ne.s32.totalorder %s71, %s74
      %p80 = scmp.eq.s32.totalorder %s19, 0
      %p81 = por %p79, %p80
      %p82 = scmp.ne.s32.totalorder %s71, %s74
      %p83 = scmp.eq.s32.totalorder %s24, 3
      %p84 = por %p82, %p83
      %p85 = scmp.ne.s32.totalorder %s74, %s75
      %p86 = scmp.eq.s32.totalorder %s24, 0
      %p87 = por %p85, %p86
      %p88 = scmp.ne.s32.totalorder %s74, %s75
      %p89 = scmp.eq.s32.totalorder %s25, 3
      %p90 = por %p88, %p89
      %p92 = scmp.ne.s32.totalorder %s75, %s91
      %p93 = scmp.eq.s32.totalorder %s25, 0
      %p94 = por %p92, %p93
      %s95 = smul.u32 %s28, %s27
      %s96 = smul.u32 %s37, %s41
      %s97 = ssub.s32 %s26, %s45
      %s98 = ssub.s32 %s95, %s96
      %s99 = sor.u32 %s97, %s98
      %p100 = scmp.eq.s32.totalorder %s99, 0
      %s102 = sadd.s32 %s101, 1
      %s103 = scalar_select %p100, %s101, %s102
      %p106 = pneg %p100
      %p107 = scmp.eq.s32.totalorder %s19, 3
      %p108 = por %p106, %p107
      %p109 = scmp.ne.s32.totalorder %s101, %s104
      %p110 = scmp.eq.s32.totalorder %s19, 0
      %p111 = por %p109, %p110
      %p112 = scmp.ne.s32.totalorder %s101, %s104
      %p113 = scmp.eq.s32.totalorder %s24, 3
      %p114 = por %p112, %p113
      %p115 = scmp.ne.s32.totalorder %s104, %s105
      %p116 = scmp.eq.s32.totalorder %s24, 0
      %p117 = por %p115, %p116
      %p118 = scmp.ne.s32.totalorder %s104, %s105
      %p119 = scmp.eq.s32.totalorder %s25, 3
      %p120 = por %p118, %p119
      %p122 = scmp.ne.s32.totalorder %s105, %s121
      %p123 = scmp.eq.s32.totalorder %s25, 0
      %p124 = por %p122, %p123
      %s125 = smul.u32 %s28, %s27
      %s126 = smul.u32 %s37, %s41
      %s127 = ssub.s32 %s26, %s45
      %s128 = ssub.s32 %s125, %s126
      %s129 = sor.u32 %s127, %s128
      %p130 = scmp.eq.s32.totalorder %s129, 0
      %s132 = sadd.s32 %s131, 1
      %s133 = scalar_select %p130, %s131, %s132
      %p136 = pneg %p130
      %p137 = scmp.eq.s32.totalorder %s19, 3
      %p138 = por %p136, %p137
      %p139 = scmp.ne.s32.totalorder %s131, %s134
      %p140 = scmp.eq.s32.totalorder %s19, 0
      %p141 = por %p139, %p140
      %p142 = scmp.ne.s32.totalorder %s131, %s134
      %p143 = scmp.eq.s32.totalorder %s24, 3
      %p144 = por %p142, %p143
      %p145 = scmp.ne.s32.totalorder %s134, %s135
      %p146 = scmp.eq.s32.totalorder %s24, 0
      %p147 = por %p145, %p146
      %p148 = scmp.ne.s32.totalorder %s134, %s135
      %p149 = scmp.eq.s32.totalorder %s25, 3
      %p150 = por %p148, %p149
      %p152 = scmp.ne.s32.totalorder %s135, %s151
      %p153 = scmp.eq.s32.totalorder %s25, 0
      %p154 = por %p152, %p153
      %p155 = scmp.le.s32.totalorder 1, %s19
      %p156 = scmp.lt.s32.totalorder %s19, 5
      %p157 = pnand %p155, %p156
      %p158 = pneg %p157
      // Predicated region
      $region9: #{tpu_custom_call.1} parent=5 // pred_check
        _
      $region10: #{tpu_custom_call.1} parent=5 // pred_check_branch
        %160 = sbr.rel (%p157) target = $region12
      $region11: #{tpu_custom_call.1} parent=5 // pred_region
        %s161 = ssub.s32 %s19, 1
        // Predicated region
        $region13: #{tpu_custom_call.1} parent=11 // pred_check
          %p162 = pneg %p59
        $region14: #{tpu_custom_call.1} parent=11 // pred_check_branch
          %164 = sbr.rel (%p162) target = $region16
        $region15: #{tpu_custom_call.1} parent=11 // pred_region
          _
        $region16: #{tpu_custom_call.1} parent=11 // pred_fallthru
          _
      $region12: #{tpu_custom_call.1} parent=5 // pred_fallthru
        _
      %p165 = scmp.lt.s32.totalorder %s19, 4
      // Predicated region
      $region17: #{tpu_custom_call.1} parent=5 // pred_check
        %p166 = pneg %p165
      $region18: #{tpu_custom_call.1} parent=5 // pred_check_branch
        %168 = sbr.rel (%p166) target = $region20
      $region19: #{tpu_custom_call.1} parent=5 // pred_region
        // Predicated region
        $region21: #{tpu_custom_call.1} parent=19 // pred_check
          %p169 = pneg %p81
        $region22: #{tpu_custom_call.1} parent=19 // pred_check_branch
          %171 = sbr.rel (%p169) target = $region24
        $region23: #{tpu_custom_call.1} parent=19 // pred_region
          %s172 = sand.u32 %s71, 1
          %s173 = scalar_lea.sflag [#allocation5], %s172
          %s174 = sand.u32 %s71, 1
          %s175 = smul.addr %s174, 8
          %s176 = scalar_lea.vmem [#allocation4], %s175
          %s177 = smul.u32 2, %s28
          %s179 = ssub.s32 128, 128
          %180 = vsyncadd %s173, %s179
          %s181 = smul.addr %s26, 2
          %s182 = sadd.s32 %s177, %s181
          %s183 = smul.addr %s182, 64
          %s184 = scalar_lea.hbm %s1, %s183
          %s186 = sshll.u32 %s176, 4
          %s187 = int_to_ptr.vmem [resolvable:$true] %s186
          %189 = dma.hbm_to_vmem [thread:$0]  %s184, 128, %s187, %s173
        $region24: #{tpu_custom_call.1} parent=19 // pred_fallthru
          _
        // Predicated region
        $region25: #{tpu_custom_call.1} parent=19 // pred_check
          %p190 = pneg %p111
        $region26: #{tpu_custom_call.1} parent=19 // pred_check_branch
          %192 = sbr.rel (%p190) target = $region28
        $region27: #{tpu_custom_call.1} parent=19 // pred_region
          %s193 = sand.u32 %s101, 1
          %s194 = scalar_lea.sflag [#allocation8], %s193
          %s195 = sand.u32 %s101, 1
          %s196 = smul.addr %s195, 8
          %s197 = scalar_lea.vmem [#allocation7], %s196
          %s198 = smul.u32 %s28, %s27
          %s199 = smul.u32 2, %s198
          %s201 = ssub.s32 128, 128
          %202 = vsyncadd %s194, %s201
          %s203 = smul.addr %s26, 2
          %s204 = sadd.s32 %s199, %s203
          %s205 = smul.addr %s204, 64
          %s206 = scalar_lea.hbm %s2, %s205
          %s208 = sshll.u32 %s197, 4
          %s209 = int_to_ptr.vmem [resolvable:$true] %s208
          %211 = dma.hbm_to_vmem [thread:$0]  %s206, 128, %s209, %s194
        $region28: #{tpu_custom_call.1} parent=19 // pred_fallthru
          _
      $region20: #{tpu_custom_call.1} parent=5 // pred_fallthru
        _
      %p212 = scmp.le.s32.totalorder 1, %s19
      %p213 = scmp.lt.s32.totalorder %s19, 5
      %p214 = pnand %p212, %p213
      %p215 = pneg %p214
      // Predicated region
      $region29: #{tpu_custom_call.1} parent=5 // pred_check
        _
      $region30: #{tpu_custom_call.1} parent=5 // pred_check_branch
        %217 = sbr.rel (%p214) target = $region32
      $region31: #{tpu_custom_call.1} parent=5 // pred_region
        %s218 = ssub.s32 %s19, 1
        %s219 = sand.u32 %s74, 1
        %s220 = scalar_lea.sflag [#allocation5], %s219
        %s221 = sand.u32 %s74, 1
        %s222 = smul.addr %s221, 8
        %s223 = scalar_lea.vmem [#allocation4], %s222
        // Predicated region
        $region33: #{tpu_custom_call.1} parent=31 // pred_check
          %p224 = pneg %p87
        $region34: #{tpu_custom_call.1} parent=31 // pred_check_branch
          %226 = sbr.rel (%p224) target = $region36
        $region35: #{tpu_custom_call.1} parent=31 // pred_region
          %227 = dma.done %s220, 128
        $region36: #{tpu_custom_call.1} parent=31 // pred_fallthru
          _
        %s228 = sand.u32 %s104, 1
        %s229 = scalar_lea.sflag [#allocation8], %s228
        %s230 = sand.u32 %s104, 1
        %s231 = smul.addr %s230, 8
        %s232 = scalar_lea.vmem [#allocation7], %s231
        // Predicated region
        $region37: #{tpu_custom_call.1} parent=31 // pred_check
          %p233 = pneg %p117
        $region38: #{tpu_custom_call.1} parent=31 // pred_check_branch
          %235 = sbr.rel (%p233) target = $region40
        $region39: #{tpu_custom_call.1} parent=31 // pred_region
          %236 = dma.done %s229, 128
        $region40: #{tpu_custom_call.1} parent=31 // pred_fallthru
          _
        %p237 = pneg %p59
        %p238 = pneg %p56
        %s239 = sand.u32 %s74, 1
        %s240 = scalar_lea.sflag [#allocation5], %s239
        %s241 = sand.u32 %s74, 1
        %s242 = smul.addr %s241, 8
        %s243 = scalar_lea.vmem [#allocation4], %s242
        %p244 = pneg %p87
        %p245 = pneg %p84
        %s246 = sand.u32 %s104, 1
        %s247 = scalar_lea.sflag [#allocation8], %s246
        %s248 = sand.u32 %s104, 1
        %s249 = smul.addr %s248, 8
        %s250 = scalar_lea.vmem [#allocation7], %s249
        %p251 = pneg %p117
        %p252 = pneg %p114
        %p253 = pneg %p147
        %p254 = pneg %p144
        %s255 = sand.u32 %s134, 1
        %s256 = scalar_lea.sflag [#allocation6], %s255
        %s257 = sand.u32 %s134, 1
        %s258 = smul.addr %s257, 8
        %s259 = scalar_lea.vmem [#allocation9], %s258
        %s260 = smul.u32 2, %s31
        %s261 = smul.u32 %s31, %s30
        %s262 = smul.u32 2, %s261
        %s263 = smul.u32 %s31, %s30
        %s264 = smul.u32 2, %s263
        %p266 = scmp.eq.s32.totalorder %s30, 0
        // Predicated region
        $region41: #{tpu_custom_call.1} parent=31 // pred_check
          %p267 = pneg %p266
        $region42: #{tpu_custom_call.1} parent=31 // pred_check_branch
          %269 = sbr.rel (%p267) target = $region44
        $region43: #{tpu_custom_call.1} parent=31 // pred_region
          %p270 = scmp.eq.s32.totalorder %s31, 0
          // Predicated region
          $region45: #{tpu_custom_call.1} parent=43 // pred_check
            %p271 = pneg %p270
          $region46: #{tpu_custom_call.1} parent=43 // pred_check_branch
            %273 = sbr.rel (%p271) target = $region48
          $region47: #{tpu_custom_call.1} parent=43 // pred_region
            %vm274 = vcmask 27648
            %275 = vst.msk [vmem:[#allocation2] sm:$0xf] %vm274, 0.0
          $region48: #{tpu_custom_call.1} parent=43 // pred_fallthru
            _
          %v276 = vld [vmem:[%s223] sm:$0xff]
          %v278 = vcombine.high %v276, %v276
          %v280 = vpack.c.bf16 %v276, %v276
          %v281 = vpack.c.bf16 %v278, %v278
          %v282 = vld [vmem:[#allocation2] sm:$0xf]
          %283 = vmatprep.subr.bf16.mxu0 0
          %284 = vmatpush1.bf16.xpose.msra.mxu0 0
          %285 = vmatprep.subr.bf16.mxu0 0
          %286 = vmatpush1.bf16.xpose.msra.mxu0 0
          %287 = vmatprep.subr.bf16.mxu0 0
          %288 = vmatpush1.bf16.xpose.msra.mxu0 0
          %289 = vmatprep.subr.bf16.mxu0 0
          %290 = vmatpush1.bf16.xpose.msra.mxu0 0
          %291 = vmatprep.subr.bf16.mxu0 0
          %292 = vmatpush1.bf16.xpose.msra.mxu0 0
          %293 = vmatprep.subr.bf16.mxu0 0
          %294 = vmatpush1.bf16.xpose.msra.mxu0 0
          %295 = vmatprep.subr.bf16.mxu0 0
          %296 = vmatpush1.bf16.xpose.msra.mxu0 0
          %297 = vmatprep.subr.bf16.mxu0 %v281
          %298 = vmatpush1.bf16.xpose.msra.mxu0 %v280
          %299 = vmatprep.subr.bf16.mxu0 0
          %300 = vmatpush2.bf16.xpose.msra.mxu0 0
          %301 = vmatprep.subr.bf16.mxu0 0
          %302 = vmatpush2.bf16.xpose.msra.mxu0 0
          %303 = vmatprep.subr.bf16.mxu0 0
          %304 = vmatpush2.bf16.xpose.msra.mxu0 0
          %305 = vmatprep.subr.bf16.mxu0 0
          %306 = vmatpush2.bf16.xpose.msra.mxu0 0
          %307 = vmatprep.subr.bf16.mxu0 0
          %308 = vmatpush2.bf16.xpose.msra.mxu0 0
          %309 = vmatprep.subr.bf16.mxu0 0
          %310 = vmatpush2.bf16.xpose.msra.mxu0 0
          %311 = vmatprep.subr.bf16.mxu0 0
          %312 = vmatpush2.bf16.xpose.msra.mxu0 0
          %313 = vmatprep.subr.bf16.mxu0 0
          %314 = vmatpush2.bf16.xpose.msra.mxu0 0
          %315 = vmatprep.mubr.bf16.mxu0 %v281
          %316 = vmatmul.mubr.bf16.gmra.mxu0 %v280
          %v317 = vpop.f32.mrf.mxu0
          %v318 = vadd.f32 0.0, %v317
          %v319 = vpop.f32.mrf.mxu0
          %v320 = vpop.f32.mrf.mxu0
          %v321 = vpop.f32.mrf.mxu0
          %322 = vdwg.mxu0
          %v323 = vadd.f32 %v282, %v318
          %vm324 = vcmask 27648
          %325 = vst.msk [vmem:[#allocation2] sm:$0xf] %vm324, %v323
        $region44: #{tpu_custom_call.1} parent=31 // pred_fallthru
          _
        %p326 = scmp.eq.s32.totalorder %s30, 1
        // Predicated region
        $region49: #{tpu_custom_call.1} parent=31 // pred_check
          %p327 = pneg %p326
        $region50: #{tpu_custom_call.1} parent=31 // pred_check_branch
          %329 = sbr.rel (%p327) target = $region52
        $region51: #{tpu_custom_call.1} parent=31 // pred_region
          %p330 = scmp.eq.s32.totalorder %s31, 0
          // Predicated region
          $region53: #{tpu_custom_call.1} parent=51 // pred_check
            %p331 = pneg %p330
          $region54: #{tpu_custom_call.1} parent=51 // pred_check_branch
            %333 = sbr.rel (%p331) target = $region56
          $region55: #{tpu_custom_call.1} parent=51 // pred_region
            %v334 = vld [vmem:[#allocation2] sm:$0xf]
            %vm335 = vcmask 27648
            %v336 = vsel %vm335, %v334, inf
            %337 = vmin.xlane.f32.xlu0 %v336
            %v338 = vpop.xlane.xlu0 %337
            %v339 = vsub.f32 %v338, %v334
            %v340 = vmul.f32 %v339, 1.442695
            %v341 = vpow.pop %v340
            %v342 = vsel %vm335, %v341, 0.0
            %343 = vadd.xlane.f32.xlu0 %v342
            %v344 = vpop.xlane.xlu0 %343
            %v345 = vrcp.pop %v344
            %v346 = vmul.f32 %v341, %v345
            %347 = vst.msk [vmem:[#allocation2] sm:$0xf] %vm335, %v346
          $region56: #{tpu_custom_call.1} parent=51 // pred_fallthru
            _
          %v348 = vld [vmem:[#allocation2] sm:$0xf]
          %v349 = vpack.c.bf16 %v348, %v348
          %v350 = vld [vmem:[%s232] sm:$0xff]
          %v352 = vcombine.high %v350, %v350
          %v354 = vpack.c.bf16 %v350, %v350
          %v355 = vpack.c.bf16 %v352, %v352
          %vm356 = vcmask 31744
          %v358 = vsel %vm356, %v349, 0
          %vm360 = vcmask 1041408
          %v362 = vsel %vm360, %v354, 0
          %v365 = vsel %vm360, %v355, 0
          %367 = vmatprep.subr.bf16.mxu0 0
          %368 = vmatpush1.bf16.msra.mxu0 0
          %369 = vmatprep.subr.bf16.mxu0 0
          %370 = vmatpush1.bf16.msra.mxu0 0
          %371 = vmatprep.subr.bf16.mxu0 0
          %372 = vmatpush1.bf16.msra.mxu0 0
          %373 = vmatprep.subr.bf16.mxu0 0
          %374 = vmatpush1.bf16.msra.mxu0 0
          %375 = vmatprep.subr.bf16.mxu0 0
          %376 = vmatpush1.bf16.msra.mxu0 0
          %377 = vmatprep.subr.bf16.mxu0 0
          %378 = vmatpush1.bf16.msra.mxu0 0
          %379 = vmatprep.subr.bf16.mxu0 0
          %380 = vmatpush1.bf16.msra.mxu0 0
          %381 = vmatprep.subr.bf16.mxu0 %v365
          %382 = vmatpush1.bf16.msra.mxu0 %v362
          %383 = vmatprep.subr.bf16.mxu0 0
          %384 = vmatpush2.bf16.msra.mxu0 0
          %385 = vmatprep.subr.bf16.mxu0 0
          %386 = vmatpush2.bf16.msra.mxu0 0
          %387 = vmatprep.subr.bf16.mxu0 0
          %388 = vmatpush2.bf16.msra.mxu0 0
          %389 = vmatprep.subr.bf16.mxu0 0
          %390 = vmatpush2.bf16.msra.mxu0 0
          %391 = vmatprep.subr.bf16.mxu0 0
          %392 = vmatpush2.bf16.msra.mxu0 0
          %393 = vmatprep.subr.bf16.mxu0 0
          %394 = vmatpush2.bf16.msra.mxu0 0
          %395 = vmatprep.subr.bf16.mxu0 0
          %396 = vmatpush2.bf16.msra.mxu0 0
          %397 = vmatprep.subr.bf16.mxu0 0
          %398 = vmatpush2.bf16.msra.mxu0 0
          %399 = vmatprep.mubr.bf16.mxu0 0
          %400 = vmatmul.mubr.bf16.gmra.mxu0 %v358
          %v401 = vpop.f32.mrf.mxu0
          %v402 = vadd.f32 0.0, %v401
          %v403 = vpop.f32.mrf.mxu0
          %v404 = vadd.f32 0.0, %v403
          %v405 = vpop.f32.mrf.mxu0
          %v406 = vpop.f32.mrf.mxu0
          %407 = vdwg.mxu0
          %s408 = sld [smem:[#allocation3]]
          %v409 = vstv %s408
          %v410 = vmul.f32 %v409, %v402
          %v411 = vmul.f32 %v409, %v404
          %v412 = vld [vmem:[%s223] sm:$0xff]
          %v414 = vcombine.high %v412, %v412
          %v416 = vadd.f32 %v410, %v412
          %v417 = vadd.f32 %v411, %v414
          %v420 = vcombine.low %v416, %v417
          %422 = vst [vmem:[%s259] sm:$0xff] %v420
        $region52: #{tpu_custom_call.1} parent=31 // pred_fallthru
          _
        %s423 = sand.u32 %s134, 1
        %s424 = scalar_lea.sflag [#allocation6], %s423
        %s425 = sand.u32 %s134, 1
        %s426 = smul.addr %s425, 8
        %s427 = scalar_lea.vmem [#allocation9], %s426
        // Predicated region
        $region57: #{tpu_custom_call.1} parent=31 // pred_check
          %p428 = pneg %p144
        $region58: #{tpu_custom_call.1} parent=31 // pred_check_branch
          %430 = sbr.rel (%p428) target = $region60
        $region59: #{tpu_custom_call.1} parent=31 // pred_region
          %s431 = smul.u32 %s31, %s30
          %s432 = smul.u32 2, %s431
          %s434 = ssub.s32 128, 128
          %435 = vsyncadd %s424, %s434
          %s436 = smul.addr %s29, 2
          %s437 = sadd.s32 %s432, %s436
          %s438 = smul.addr %s437, 64
          %s439 = scalar_lea.hbm %s3, %s438
          %s441 = sshll.u32 %s427, 4
          %s442 = int_to_ptr.vmem [resolvable:$true] %s441
          %444 = dma.vmem_to_hbm [thread:$0]  %s442, 128, %s439, %s424
        $region60: #{tpu_custom_call.1} parent=31 // pred_fallthru
          _
      $region32: #{tpu_custom_call.1} parent=5 // pred_fallthru
        _
      %p445 = scmp.le.s32.totalorder 2, %s19
      // Predicated region
      $region61: #{tpu_custom_call.1} parent=5 // pred_check
        %p446 = pneg %p445
      $region62: #{tpu_custom_call.1} parent=5 // pred_check_branch
        %448 = sbr.rel (%p446) target = $region64
      $region63: #{tpu_custom_call.1} parent=5 // pred_region
        %s449 = ssub.s32 %s19, 2
        // Predicated region
        $region65: #{tpu_custom_call.1} parent=63 // pred_check
          %p450 = pneg %p150
        $region66: #{tpu_custom_call.1} parent=63 // pred_check_branch
          %452 = sbr.rel (%p450) target = $region68
        $region67: #{tpu_custom_call.1} parent=63 // pred_region
          %s453 = sand.u32 %s135, 1
          %s454 = scalar_lea.sflag [#allocation6], %s453
          %s455 = sand.u32 %s135, 1
          %s456 = smul.addr %s455, 8
          %s457 = scalar_lea.vmem [#allocation9], %s456
          %458 = dma.done %s454, 128
        $region68: #{tpu_custom_call.1} parent=63 // pred_fallthru
          _
      $region64: #{tpu_custom_call.1} parent=5 // pred_fallthru
        _
    $region6: #{tpu_custom_call.1} parent=1 // loop_footer
      %s23 = sadd.s32 1, %s19
    $region7: #{tpu_custom_call.1} parent=1 // loop_footer_branch
      %18 = sbr.rel target = $region3
    $region8: #{tpu_custom_call.1} parent=1 // loop_exit
      _
    %459 = vsyncpa [#allocation5], 1
    %s460 = scalar_lea.sflag [#allocation5], 1
    %461 = vsyncpa %s460, 1
    %462 = vsyncpa [#allocation8], 1
    %s463 = scalar_lea.sflag [#allocation8], 1
    %464 = vsyncpa %s463, 1
    %465 = vsyncpa [#allocation6], 1
    %s466 = scalar_lea.sflag [#allocation6], 1
    %467 = vsyncpa %s466, 1

</llo_original>
